<compile_context>
chip_gen: v6e
topology: v6e:2x2x1
jax: 0.10.0
libtpu: 0.0.40
codegen_flags: <defaults>
</compile_context>

<pallas_src>
import jax
import jax.numpy as jnp
from jax.experimental import pallas as pl
from jax.experimental.pallas import tpu as pltpu  # noqa: F401  (TPU backend)


def _softplus_row_kernel(disp_ref, out_ref):
    # disp_ref / out_ref: (1, dim_z) in VMEM.
    x = disp_ref[...].astype(jnp.float32)  # f32 compute regardless of param dtype
    # Softplus matching torch.nn.Softplus defaults (beta=1, threshold=20):
    #   x > 20 -> x ;  else -> log(1 + exp(x))   (clamp exp arg for safety)
    sp = jnp.log1p(jnp.exp(jnp.minimum(x, 20.0)))
    out_ref[...] = jnp.where(x > 20.0, x, sp).astype(out_ref.dtype)


def dispnet_forward(mu: jax.Array, t: jax.Array, fixed_disp: jax.Array) -> jax.Array:
    """Pallas implementation of DispNet.forward.

    mu: (batch, dim_mu)   -- only the batch size is used (matches PyTorch)
    t:  (batch, 1)        -- unused by the forward pass
    fixed_disp: (1, dim_z) parameter
    returns: (batch, dim_z) = softplus(fixed_disp) broadcast over batch
    """
    del t  # unused, as in the reference module
    batch = mu.shape[0]
    dim_z = fixed_disp.shape[1]

    # Kernel computes softplus once on the (1, dim_z) parameter row.
    row = pl.pallas_call(
        _softplus_row_kernel,
        out_shape=jax.ShapeDtypeStruct((1, dim_z), fixed_disp.dtype),
        in_specs=[pl.BlockSpec((1, dim_z), lambda: (0, 0))],
        out_specs=pl.BlockSpec((1, dim_z), lambda: (0, 0)),
    )(fixed_disp)

    # Broadcast the finished row to (batch, dim_z) outside the kernel:
    # XLA broadcast_in_dim is free / fuses with downstream consumers, so we do
    # not burn DMA/vst bandwidth writing `batch` identical rows from the kernel.
    return jnp.broadcast_to(row, (batch, dim_z))


if __name__ == "__main__":
    key = jax.random.PRNGKey(0)
    k_mu, k_t = jax.random.split(key)

    batch = 2
    dim_z = 32     # config.dim_z
    dim_mu = 8     # latent input size (only the batch dim matters in forward)

    mu = jax.random.normal(k_mu, (batch, dim_mu), dtype=jnp.float32)
    t = jax.random.normal(k_t, (batch, 1), dtype=jnp.float32)

    # Deterministic parameter init, exactly as in __init__: ones((1, dim_z)).
    fixed_disp = jnp.ones((1, dim_z), dtype=jnp.float32)

    out = dispnet_forward(mu, t, fixed_disp)
    out = jax.block_until_ready(out)

    # Sanity check against plain-JAX reference (softplus of broadcast ones).
    ref = jax.nn.softplus(jnp.broadcast_to(fixed_disp, (batch, dim_z)))
    assert out.shape == (batch, dim_z)
    assert jnp.allclose(out, ref, atol=1e-6), "mismatch vs reference softplus"

    print("KERNEL_OK")
</pallas_src>

<mosaic_0001>
module attributes {stable_mosaic.version = 11 : i64} {
  func.func @_softplus_row_kernel(%arg0: memref<1x32xf32, #tpu.memory_space<vmem>>, %arg1: memref<1x32xf32, #tpu.memory_space<vmem>>) attributes {dimension_semantics = [], scalar_prefetch = 0 : i64, scratch_operands = 0 : i64, tpu.core_type = #tpu.core_type<tc>} {
    %c0 = arith.constant 0 : index
    %c0_0 = arith.constant 0 : index
    %0 = vector.load %arg0[%c0, %c0_0] : memref<1x32xf32, #tpu.memory_space<vmem>>, vector<1x32xf32>
    %cst = arith.constant 2.000000e+01 : f32
    %1 = vector.broadcast %cst : f32 to vector<1x32xf32>
    %2 = arith.minimumf %0, %1 : vector<1x32xf32>
    %3 = math.exp %2 : vector<1x32xf32>
    %4 = math.log1p %3 : vector<1x32xf32>
    %cst_1 = arith.constant 2.000000e+01 : f32
    %5 = vector.broadcast %cst_1 : f32 to vector<1x32xf32>
    %6 = arith.cmpf ogt, %0, %5 : vector<1x32xf32>
    %7 = arith.select %6, %0, %4 : vector<1x32xi1>, vector<1x32xf32>
    %c0_2 = arith.constant 0 : index
    %c0_3 = arith.constant 0 : index
    %8 = vector.load %arg1[%c0_2, %c0_3] : memref<1x32xf32, #tpu.memory_space<vmem>>, vector<1x32xf32>
    tpu.vector_store %arg1[%c0_2, %c0_3], %7 {strides = array<i32>} : memref<1x32xf32, #tpu.memory_space<vmem>>, vector<1x32xf32>,
    return
  }
}

</mosaic_0001>

<llo_original>
// kernel: tpu_custom_call.1
$region0: #{tpu_custom_call.1}
  #allocation0 [shape = 'u32[]', space=smem, size = 0x4, offset = 0x4, fixed_abs, tag = 'smem constant byte address 0x4 - core index']
  #allocation1 [shape = 'u32[144,128]{1,0:T(1,128)}', space=vmem, size = 0x12000, scoped, tag = 'internal scratch']
  %s0 = inlined_call_operand.hbm [shape: f32[1,32], index: 0, kind: input, shape index: {}]
  %s1 = inlined_call_operand.hbm [shape: f32[1,32], index: 1, kind: output, shape index: {}]
  %s2 = sld [smem:[#allocation0]]
  $region18: #{tpu_custom_call.1} parent=0
    _
  %s4 = ssub.s32 1, %s2
  %s5 = scalar_select 0, %s4, %s2
  $region1: #{tpu_custom_call.1} parent=0
    #allocation2 [shape = 'u8[512]{0}', space=vmem, size = 0x400, scoped, tag = 'input window, operand 0, single buffered']
    #allocation3 [shape = 's32[1]{0}', space=sflag, size = 0x4, scoped, tag = 'scoped memory for tpu_custom_call.1']
    #allocation4 [shape = 's32[1]{0}', space=sflag, size = 0x4, scoped, tag = 'scoped memory for tpu_custom_call.1']
    #allocation5 [shape = 'u8[512]{0}', space=vmem, size = 0x400, scoped, tag = 'output window, operand 0, single buffered']
    %6 = vsyncpa [#allocation3], 0
    %7 = vsyncpa [#allocation4], 0
    // Predicated region
    $region2: #{tpu_custom_call.1} parent=1 // pred_check
      _
    $region3: #{tpu_custom_call.1} parent=1 // pred_check_branch
      %9 = sbr.rel (0) target = $region5
    $region4: #{tpu_custom_call.1} parent=1 // pred_region
      %s11 = ssub.s32 16, 16
      %12 = vsyncadd [#allocation3], %s11
      %s14 = sshll.u32 [#allocation2], 4
      %s15 = int_to_ptr.vmem [resolvable:$true] %s14
      %17 = dma.hbm_to_vmem [thread:$0]  %s0, 16, %s15, [#allocation3]
    $region5: #{tpu_custom_call.1} parent=1 // pred_fallthru
      _
    // Predicated region
    $region6: #{tpu_custom_call.1} parent=1 // pred_check
      _
    $region7: #{tpu_custom_call.1} parent=1 // pred_check_branch
      %19 = sbr.rel (0) target = $region9
    $region8: #{tpu_custom_call.1} parent=1 // pred_region
      %20 = dma.done [#allocation3], 16
    $region9: #{tpu_custom_call.1} parent=1 // pred_fallthru
      _
    %v21 = vld [vmem:[#allocation2] sm:$0x1]
    %v22 = vmin.f32 %v21, 20.0
    %v23 = vmul.f32 %v22, 1.442695
    %v24 = vpow.pop %v23
    %v25 = vadd.f32 %v24, 1.0
    %v26 = vlog2.pop %v25
    %v27 = vmul.f32 %v26, 0.6931472
    %v28 = vmul.f32 -0.5, %v24
    %v29 = vadd.f32 %v28, 1.0
    %v30 = vmul.f32 %v29, %v24
    %v31 = vand.u32 2147483647, %v24
    %vm32 = vcmp.lt.f32.partialorder %v31, 0.0004427343
    %v33 = vsel %vm32, %v30, %v27
    %vm34 = vcmp.gt.f32.partialorder %v21, 20.0
    %v35 = vsel %vm34, %v21, %v33
    %vm36 = vcmask 253952
    %37 = vst.msk [vmem:[#allocation5] sm:$0x1] %vm36, %v35
    // Predicated region
    $region10: #{tpu_custom_call.1} parent=1 // pred_check
      _
    $region11: #{tpu_custom_call.1} parent=1 // pred_check_branch
      %39 = sbr.rel (0) target = $region13
    $region12: #{tpu_custom_call.1} parent=1 // pred_region
      %s41 = ssub.s32 16, 16
      %42 = vsyncadd [#allocation4], %s41
      %s44 = sshll.u32 [#allocation5], 4
      %s45 = int_to_ptr.vmem [resolvable:$true] %s44
      %47 = dma.vmem_to_hbm [thread:$0]  %s45, 16, %s1, [#allocation4]
    $region13: #{tpu_custom_call.1} parent=1 // pred_fallthru
      _
    // Predicated region
    $region14: #{tpu_custom_call.1} parent=1 // pred_check
      _
    $region15: #{tpu_custom_call.1} parent=1 // pred_check_branch
      %49 = sbr.rel (0) target = $region17
    $region16: #{tpu_custom_call.1} parent=1 // pred_region
      %50 = dma.done [#allocation4], 16
    $region17: #{tpu_custom_call.1} parent=1 // pred_fallthru
      _
    %51 = vsyncpa [#allocation3], 1
    %52 = vsyncpa [#allocation4], 1

</llo_original>
